<compile_context>
chip_gen: v5e
topology: v5e:2x2
jax: 0.10.0
libtpu: 0.0.40
codegen_flags: <defaults>
</compile_context>

<pallas_src>
import functools

import jax
import jax.numpy as jnp
from jax.experimental import pallas as pl
from jax.experimental.pallas import tpu as pltpu


# ----------------------------- helpers ------------------------------------


def _round_up(x, m):
    return (x + m - 1) // m * m


def _pad2(x, rows, cols):
    return jnp.pad(x, ((0, rows - x.shape[0]), (0, cols - x.shape[1])))


def _pad_gate_cols(w, h, hp):
    """(rows, 3*h) -> (rows, 3*hp) with gate g living at columns [g*hp, g*hp+h)."""
    parts = [jnp.pad(w[:, g * h:(g + 1) * h], ((0, 0), (0, hp - h))) for g in range(3)]
    return jnp.concatenate(parts, axis=1)


# ----------------------------- kernel --------------------------------------


def _attn_decoder_kernel(emb_ref, hid_ref, encca_ref, w_ref, bias_ref,
                         logp_ref, newh_ref, attw_ref, h_scr,
                         *, L, V, LP, HP, VP):
    """One decode step per grid index t; hidden carried in h_scr across t."""
    f32, bf16 = jnp.float32, jnp.bfloat16
    NEG = jnp.float32(-1e30)
    t = pl.program_id(0)

    # Load the initial hidden state into the carry scratch on the first step.
    @pl.when(t == 0)
    def _():
        h_scr[...] = hid_ref[...]

    emb = emb_ref[0]                          # (BP, HP) bf16 == embedded[0] (dropout=id)
    hid = h_scr[...]                          # (BP, HP) f32  == hidden[0]
    hid_bf = hid.astype(bf16)

    # Static, 128-lane-aligned views into the packed weight / bias slabs.
    o1 = LP + HP                              # end of w_e  (attn emb-half | combine emb-half)
    o2 = o1 + LP + 3 * HP                     # end of w_h  (attn hid-half | GRU hh gates r,z,n)
    o3 = o2 + 3 * HP                          # end of w_ih
    o4 = o3 + VP                              # end of w_out
    w_e, w_h = w_ref[:, 0:o1], w_ref[:, o1:o2]
    w_ih, w_out = w_ref[:, o2:o3], w_ref[:, o3:o4]

    off = 0
    ba = bias_ref[:, off:off + LP]; off += LP
    bc = bias_ref[:, off:off + HP]; off += HP
    bih = bias_ref[:, off:off + 3 * HP]; off += 3 * HP
    bhh = bias_ref[:, off:off + 3 * HP]; off += 3 * HP
    bout = bias_ref[:, off:off + VP]

    # Fused shared-operand GEMMs (f32 accumulate on the MXU).
    egemm = jnp.dot(emb, w_e, preferred_element_type=f32)       # (BP, LP+HP)
    hgemm = jnp.dot(hid_bf, w_h, preferred_element_type=f32)    # (BP, LP+3HP)

    # attn(cat(embedded[0], hidden[0])) -> masked, numerically-stable, EXACT softmax.
    logits_a = egemm[:, :LP] + hgemm[:, :LP] + ba               # (BP, LP)
    lane = jax.lax.broadcasted_iota(jnp.int32, logits_a.shape, 1)
    logits_a = jnp.where(lane < L, logits_a, NEG)
    m = jnp.max(logits_a, axis=1, keepdims=True)
    e = jnp.exp(logits_a - m)
    attw = e / jnp.sum(e, axis=1, keepdims=True)
    attw_ref[0] = attw

    # attn_combine(cat(embedded[0], attn_applied[0])) then ReLU, where
    # attn_applied @ W_combine_attn has been re-associated to attw @ (enc @ W_combine_attn).
    comb = (egemm[:, LP:LP + HP] + bc
            + jnp.dot(attw.astype(bf16), encca_ref[...], preferred_element_type=f32))
    x = jnp.maximum(comb, 0.0)

    # Single-step GRU cell, PyTorch gate order (r, z, n); gate slices are 128-lane aligned.
    gi = jnp.dot(x.astype(bf16), w_ih, preferred_element_type=f32) + bih
    gh = hgemm[:, LP:] + bhh
    r = jax.nn.sigmoid(gi[:, 0:HP] + gh[:, 0:HP])
    z = jax.nn.sigmoid(gi[:, HP:2 * HP] + gh[:, HP:2 * HP])
    n = jnp.tanh(gi[:, 2 * HP:3 * HP] + r * gh[:, 2 * HP:3 * HP])
    h_new = (1.0 - z) * n + z * hid                             # (BP, HP) f32
    h_scr[...] = h_new                                          # carry to next step
    newh_ref[...] = h_new                                       # resident; written back at end

    # out(...) + masked, exact log_softmax(dim=1).
    logits_o = jnp.dot(h_new.astype(bf16), w_out, preferred_element_type=f32) + bout
    lane_o = jax.lax.broadcasted_iota(jnp.int32, logits_o.shape, 1)
    logits_o = jnp.where(lane_o < V, logits_o, NEG)
    m2 = jnp.max(logits_o, axis=1, keepdims=True)
    lse = jnp.log(jnp.sum(jnp.exp(logits_o - m2), axis=1, keepdims=True)) + m2
    logp_ref[0] = logits_o - lse


# ----------------------------- wrapper --------------------------------------


def make_attn_decoder(params, max_length):
    """Pads / fuses / casts the PyTorch-layout params once and returns
    (forward, decode):
      forward(token_ids (1,B), hidden (1,B,H), enc (L,H)) -> single step (module semantics)
      decode(token_ids (T,B), hidden (1,B,H), enc (L,H))  -> T teacher-forced steps,
                                                             one pallas_call."""
    H = params["embedding"].shape[1]
    V = params["out_w"].shape[1]
    L = max_length
    HP = _round_up(H, 128)
    LP = _round_up(L, 128)
    VP = _round_up(V, 128)
    WTOT = 2 * LP + 7 * HP + VP
    BTOT = LP + 7 * HP + VP
    bf16 = jnp.bfloat16

    wa, wc = params["attn_w"], params["combine_w"]
    wa_e, wa_h = _pad2(wa[:H], HP, LP), _pad2(wa[H:], HP, LP)
    wc_e = _pad2(wc[:H], HP, HP)
    wih = _pad_gate_cols(jnp.pad(params["w_ih"], ((0, HP - H), (0, 0))), H, HP)
    whh = _pad_gate_cols(jnp.pad(params["w_hh"], ((0, HP - H), (0, 0))), H, HP)
    wout = _pad2(params["out_w"], HP, VP)

    # Single bf16 weight slab: [w_e | w_h | w_ih | w_out], all HP rows.
    w_slab = jnp.concatenate([wa_e, wc_e, wa_h, whh, wih, wout], axis=1).astype(bf16)
    assert w_slab.shape == (HP, WTOT)

    # Single f32 bias slab.
    bias = jnp.concatenate([
        _pad2(params["attn_b"], 1, LP),
        _pad2(params["combine_b"], 1, HP),
        _pad_gate_cols(params["b_ih"], H, HP),
        _pad_gate_cols(params["b_hh"], H, HP),
        _pad2(params["out_b"], 1, VP),
    ], axis=1).astype(jnp.float32)
    assert bias.shape == (1, BTOT)

    embedding = params["embedding"]
    wc_attn = wc[H:]                      # (H, H): combine weight, attn_applied half

    kernel = functools.partial(_attn_decoder_kernel, L=L, V=V, LP=LP, HP=HP, VP=VP)

    @jax.jit
    def decode(token_ids, hidden, encoder_outputs):
        T, B = token_ids.shape
        BP = max(16, _round_up(B, 16))    # bf16 layout tile is (16, 128)

        # One embedding gather + pad/cast per decode call (amortized over T steps).
        emb_all = jnp.pad(embedding[token_ids],
                          ((0, 0), (0, BP - B), (0, HP - H))).astype(bf16)   # (T, BP, HP)
        hid_p = _pad2(hidden[0], BP, HP).astype(jnp.float32)                 # (BP, HP)
        # Re-association pre-fold: enc_ca = encoder_outputs @ W_combine_attn.
        enc_ca = _pad2(encoder_outputs @ wc_attn, LP, HP).astype(bf16)       # (LP, HP)

        grid_spec = pltpu.PrefetchScalarGridSpec(
            num_scalar_prefetch=0,
            grid=(T,),
            in_specs=[
                pl.BlockSpec((1, BP, HP), lambda t: (t, 0, 0)),   # per-step embedding
                pl.BlockSpec((BP, HP), lambda t: (0, 0)),         # initial hidden (resident)
                pl.BlockSpec((LP, HP), lambda t: (0, 0)),         # enc @ W_combine_attn
                pl.BlockSpec((HP, WTOT), lambda t: (0, 0)),       # fused weight slab
                pl.BlockSpec((1, BTOT), lambda t: (0, 0)),        # fused bias slab
            ],
            out_specs=(
                pl.BlockSpec((1, BP, VP), lambda t: (t, 0, 0)),   # log-probs per step
                pl.BlockSpec((BP, HP), lambda t: (0, 0)),         # final hidden
                pl.BlockSpec((1, BP, LP), lambda t: (t, 0, 0)),   # attn weights per step
            ),
            scratch_shapes=[pltpu.VMEM((BP, HP), jnp.float32)],   # hidden carry across t
        )

        logp_p, newh_p, attw_p = pl.pallas_call(
            kernel,
            out_shape=(
                jax.ShapeDtypeStruct((T, BP, VP), jnp.float32),
                jax.ShapeDtypeStruct((BP, HP), jnp.float32),
                jax.ShapeDtypeStruct((T, BP, LP), jnp.float32),
            ),
            grid_spec=grid_spec,
            compiler_params=pltpu.CompilerParams(
                dimension_semantics=("arbitrary",),               # time axis is sequential
                vmem_limit_bytes=64 * 1024 * 1024,
            ),
        )(emb_all, hid_p, enc_ca, w_slab, bias)

        return (logp_p[:, :B, :V], newh_p[None, :B, :H], attw_p[:, :B, :L])

    def forward(token_ids, hidden, encoder_outputs):
        """Single decoder step, matching AttnDecoderRNN.forward exactly."""
        logp, new_h, attw = decode(token_ids, hidden, encoder_outputs)
        return logp[0], new_h, attw[0]

    return forward, decode


def init_params(key, vocab, hidden_size, max_length):
    H, L, V = hidden_size, max_length, vocab
    ks = jax.random.split(key, 11)

    def lin(k, fan_in, shape):
        bound = 1.0 / float(fan_in) ** 0.5
        return jax.random.uniform(k, shape, jnp.float32, -bound, bound)

    return dict(
        embedding=jax.random.normal(ks[0], (V, H), jnp.float32),
        attn_w=lin(ks[1], 2 * H, (2 * H, L)),       # Linear(2H -> max_length), transposed
        attn_b=lin(ks[2], 2 * H, (1, L)),
        combine_w=lin(ks[3], 2 * H, (2 * H, H)),    # Linear(2H -> H), transposed
        combine_b=lin(ks[4], 2 * H, (1, H)),
        w_ih=lin(ks[5], H, (H, 3 * H)),             # GRU weight_ih_l0, transposed (r,z,n)
        b_ih=lin(ks[6], H, (1, 3 * H)),
        w_hh=lin(ks[7], H, (H, 3 * H)),             # GRU weight_hh_l0, transposed (r,z,n)
        b_hh=lin(ks[8], H, (1, 3 * H)),
        out_w=lin(ks[9], H, (H, V)),                # Linear(H -> vocab), transposed
        out_b=lin(ks[10], H, (1, V)),
    )


if __name__ == "__main__":
    B, H, L, V, T = 2, 32, 8, 64, 5   # batch, hidden_size, max_length, vocab, decode steps

    key = jax.random.PRNGKey(0)
    k_param, k_tok, k_enc = jax.random.split(key, 3)

    params = init_params(k_param, V, H, L)
    forward, decode = make_attn_decoder(params, max_length=L)

    tokens = jax.random.randint(k_tok, (T, B), 0, V, dtype=jnp.int32)
    hidden0 = jnp.zeros((1, B, H), jnp.float32)                           # init_hidden
    encoder_outputs = jax.random.normal(k_enc, (L, H), jnp.float32)

    # --- single step: exact AttnDecoderRNN.forward semantics ---
    log_probs, new_hidden, attn_weights = forward(tokens[:1], hidden0, encoder_outputs)
    jax.block_until_ready((log_probs, new_hidden, attn_weights))
    assert log_probs.shape == (B, V)
    assert new_hidden.shape == (1, B, H)
    assert attn_weights.shape == (B, L)
    # attention weights and exp(log_probs) are valid distributions (exact softmax now)
    assert jnp.allclose(jnp.sum(attn_weights, axis=1), 1.0, atol=1e-3)
    assert jnp.allclose(jnp.sum(jnp.exp(log_probs), axis=1), 1.0, atol=1e-2)

    # --- fused T-step decode (one pallas_call) matches T sequential single steps ---
    logp_all, hid_all, attw_all = decode(tokens, hidden0, encoder_outputs)
    jax.block_until_ready((logp_all, hid_all, attw_all))

    hid = hidden0
    logp_seq, attw_seq = [], []
    for t in range(T):
        lp, hid, aw = forward(tokens[t:t + 1], hid, encoder_outputs)
        logp_seq.append(lp)
        attw_seq.append(aw)
    logp_seq = jnp.stack(logp_seq)
    attw_seq = jnp.stack(attw_seq)

    assert jnp.allclose(logp_all, logp_seq, atol=1e-4, rtol=1e-4)
    assert jnp.allclose(attw_all, attw_seq, atol=1e-5, rtol=1e-4)
    assert jnp.allclose(hid_all, hid, atol=1e-4, rtol=1e-4)

    print("KERNEL_OK")
</pallas_src>

<mosaic_0001>
module attributes {stable_mosaic.version = 11 : i64} {
  func.func @_attn_decoder_kernel(%arg0: i32, %arg1: memref<1x16x128xbf16, #tpu.memory_space<vmem>>, %arg2: memref<16x128xf32, #tpu.memory_space<vmem>>, %arg3: memref<128x128xbf16, #tpu.memory_space<vmem>>, %arg4: memref<128x1280xbf16, #tpu.memory_space<vmem>>, %arg5: memref<1x1152xf32, #tpu.memory_space<vmem>>, %arg6: memref<1x16x128xf32, #tpu.memory_space<vmem>>, %arg7: memref<16x128xf32, #tpu.memory_space<vmem>>, %arg8: memref<1x16x128xf32, #tpu.memory_space<vmem>>, %arg9: memref<16x128xf32, #tpu.memory_space<vmem>>) attributes {dimension_semantics = [#tpu.dimension_semantics<arbitrary>], iteration_bounds = array<i64: 1>, scalar_prefetch = 0 : i64, scratch_operands = 1 : i64, tpu.core_type = #tpu.core_type<tc>, window_params = [{transform_indices = @transform_0, window_bounds = array<i64: 1, 16, 128>}, {pipeline_mode = #tpu.pipeline_mode<synchronous>, transform_indices = @transform_1, window_bounds = array<i64: 16, 128>}, {pipeline_mode = #tpu.pipeline_mode<synchronous>, transform_indices = @transform_2, window_bounds = array<i64: 128, 128>}, {pipeline_mode = #tpu.pipeline_mode<synchronous>, transform_indices = @transform_3, window_bounds = array<i64: 128, 1280>}, {pipeline_mode = #tpu.pipeline_mode<synchronous>, transform_indices = @transform_4, window_bounds = array<i64: 1, 1152>}, {transform_indices = @transform_5, window_bounds = array<i64: 1, 16, 128>}, {pipeline_mode = #tpu.pipeline_mode<synchronous>, transform_indices = @transform_6, window_bounds = array<i64: 16, 128>}, {transform_indices = @transform_7, window_bounds = array<i64: 1, 16, 128>}]} {
    %c0_i32 = arith.constant 0 : i32
    %0 = arith.cmpi eq, %arg0, %c0_i32 : i32
    %1 = arith.extui %0 : i1 to i32
    %c0_i32_0 = arith.constant 0 : i32
    %2 = arith.cmpi ne, %1, %c0_i32_0 : i32
    scf.if %2 {
      %c0_43 = arith.constant 0 : index
      %c0_44 = arith.constant 0 : index
      %107 = vector.load %arg2[%c0_43, %c0_44] : memref<16x128xf32, #tpu.memory_space<vmem>>, vector<16x128xf32>
      %c0_45 = arith.constant 0 : index
      %c0_46 = arith.constant 0 : index
      %108 = vector.load %arg9[%c0_45, %c0_46] : memref<16x128xf32, #tpu.memory_space<vmem>>, vector<16x128xf32>
      tpu.vector_store %arg9[%c0_45, %c0_46], %107 {strides = array<i32>} : memref<16x128xf32, #tpu.memory_space<vmem>>, vector<16x128xf32>,
    } else {
    }
    %c0 = arith.constant 0 : index
    %c0_1 = arith.constant 0 : index
    %c0_2 = arith.constant 0 : index
    %3 = vector.load %arg1[%c0, %c0_1, %c0_2] : memref<1x16x128xbf16, #tpu.memory_space<vmem>>, vector<1x16x128xbf16>
    %4 = vector.shape_cast %3 : vector<1x16x128xbf16> to vector<16x128xbf16>
    %c0_3 = arith.constant 0 : index
    %c0_4 = arith.constant 0 : index
    %5 = vector.load %arg9[%c0_3, %c0_4] : memref<16x128xf32, #tpu.memory_space<vmem>>, vector<16x128xf32>
    %6 = arith.truncf %5 : vector<16x128xf32> to vector<16x128xbf16>
    %c0_5 = arith.constant 0 : index
    %c0_6 = arith.constant 0 : index
    %7 = vector.load %arg4[%c0_5, %c0_6] : memref<128x1280xbf16, #tpu.memory_space<vmem>>, vector<128x256xbf16>
    %c0_7 = arith.constant 0 : index
    %c256 = arith.constant 256 : index
    %8 = vector.load %arg4[%c0_7, %c256] : memref<128x1280xbf16, #tpu.memory_space<vmem>>, vector<128x512xbf16>
    %c0_8 = arith.constant 0 : index
    %c768 = arith.constant 768 : index
    %9 = vector.load %arg4[%c0_8, %c768] : memref<128x1280xbf16, #tpu.memory_space<vmem>>, vector<128x384xbf16>
    %c0_9 = arith.constant 0 : index
    %c1152 = arith.constant 1152 : index
    %10 = vector.load %arg4[%c0_9, %c1152] : memref<128x1280xbf16, #tpu.memory_space<vmem>>, vector<128x128xbf16>
    %c0_10 = arith.constant 0 : index
    %c0_11 = arith.constant 0 : index
    %11 = vector.load %arg5[%c0_10, %c0_11] : memref<1x1152xf32, #tpu.memory_space<vmem>>, vector<1x128xf32>
    %c0_12 = arith.constant 0 : index
    %c128 = arith.constant 128 : index
    %12 = vector.load %arg5[%c0_12, %c128] : memref<1x1152xf32, #tpu.memory_space<vmem>>, vector<1x128xf32>
    %c0_13 = arith.constant 0 : index
    %c256_14 = arith.constant 256 : index
    %13 = vector.load %arg5[%c0_13, %c256_14] : memref<1x1152xf32, #tpu.memory_space<vmem>>, vector<1x384xf32>
    %c0_15 = arith.constant 0 : index
    %c640 = arith.constant 640 : index
    %14 = vector.load %arg5[%c0_15, %c640] : memref<1x1152xf32, #tpu.memory_space<vmem>>, vector<1x384xf32>
    %c0_16 = arith.constant 0 : index
    %c1024 = arith.constant 1024 : index
    %15 = vector.load %arg5[%c0_16, %c1024] : memref<1x1152xf32, #tpu.memory_space<vmem>>, vector<1x128xf32>
    %cst = arith.constant dense<0.000000e+00> : vector<16x256xf32>
    %16 = tpu.matmul %4, %7, %cst {dimension_numbers = #tpu.dot_dimension_numbers<[1], [0], [0], [1], [0, 0, 1, 1], [], []>} : vector<16x128xbf16>, vector<128x256xbf16>, vector<16x256xf32> -> vector<16x256xf32>
    %cst_17 = arith.constant dense<0.000000e+00> : vector<16x512xf32>
    %17 = tpu.matmul %6, %8, %cst_17 {dimension_numbers = #tpu.dot_dimension_numbers<[1], [0], [0], [1], [0, 0, 1, 1], [], []>} : vector<16x128xbf16>, vector<128x512xbf16>, vector<16x512xf32> -> vector<16x512xf32>
    %18 = vector.extract_strided_slice %16 {offsets = [0, 0], sizes = [16, 128], strides = [1, 1]} : vector<16x256xf32> to vector<16x128xf32>
    %19 = vector.extract_strided_slice %17 {offsets = [0, 0], sizes = [16, 128], strides = [1, 1]} : vector<16x512xf32> to vector<16x128xf32>
    %20 = arith.addf %18, %19 : vector<16x128xf32>
    %21 = vector.broadcast %11 : vector<1x128xf32> to vector<16x128xf32>
    %22 = arith.addf %20, %21 : vector<16x128xf32>
    %23 = tpu.iota {dimensions = array<i32: 1>} : vector<16x128xi32>
    %c8_i32 = arith.constant 8 : i32
    %24 = vector.broadcast %c8_i32 : i32 to vector<16x128xi32>
    %25 = arith.cmpi slt, %23, %24 : vector<16x128xi32>
    %cst_18 = arith.constant -1.000000e+30 : f32
    %26 = vector.broadcast %cst_18 : f32 to vector<16x128xf32>
    %27 = arith.select %25, %22, %26 : vector<16x128xi1>, vector<16x128xf32>
    %cst_19 = arith.constant dense<0xFF800000> : vector<16xf32>
    %28 = vector.multi_reduction <maximumf>, %27, %cst_19 [1] : vector<16x128xf32> to vector<16xf32>
    %29 = vector.shape_cast %28 : vector<16xf32> to vector<16x1xf32>
    %30 = vector.broadcast %29 : vector<16x1xf32> to vector<16x128xf32>
    %31 = arith.subf %27, %30 : vector<16x128xf32>
    %32 = math.exp %31 : vector<16x128xf32>
    %cst_20 = arith.constant dense<0.000000e+00> : vector<16xf32>
    %33 = vector.multi_reduction <add>, %32, %cst_20 [1] : vector<16x128xf32> to vector<16xf32>
    %34 = vector.shape_cast %33 : vector<16xf32> to vector<16x1xf32>
    %35 = vector.broadcast %34 : vector<16x1xf32> to vector<16x128xf32>
    %36 = arith.divf %32, %35 : vector<16x128xf32>
    %c0_21 = arith.constant 0 : index
    %c0_22 = arith.constant 0 : index
    %c0_23 = arith.constant 0 : index
    %37 = vector.load %arg8[%c0_21, %c0_22, %c0_23] : memref<1x16x128xf32, #tpu.memory_space<vmem>>, vector<1x16x128xf32>
    %38 = vector.shape_cast %37 : vector<1x16x128xf32> to vector<16x128xf32>
    %39 = vector.shape_cast %36 : vector<16x128xf32> to vector<1x16x128xf32>
    tpu.vector_store %arg8[%c0_21, %c0_22, %c0_23], %39 {strides = array<i32>} : memref<1x16x128xf32, #tpu.memory_space<vmem>>, vector<1x16x128xf32>,
    %40 = vector.extract_strided_slice %16 {offsets = [0, 128], sizes = [16, 128], strides = [1, 1]} : vector<16x256xf32> to vector<16x128xf32>
    %41 = vector.broadcast %12 : vector<1x128xf32> to vector<16x128xf32>
    %42 = arith.addf %40, %41 : vector<16x128xf32>
    %43 = arith.truncf %36 : vector<16x128xf32> to vector<16x128xbf16>
    %c0_24 = arith.constant 0 : index
    %c0_25 = arith.constant 0 : index
    %44 = vector.load %arg3[%c0_24, %c0_25] : memref<128x128xbf16, #tpu.memory_space<vmem>>, vector<128x128xbf16>
    %cst_26 = arith.constant dense<0.000000e+00> : vector<16x128xf32>
    %45 = tpu.matmul %43, %44, %cst_26 {dimension_numbers = #tpu.dot_dimension_numbers<[1], [0], [0], [1], [0, 0, 1, 1], [], []>} : vector<16x128xbf16>, vector<128x128xbf16>, vector<16x128xf32> -> vector<16x128xf32>
    %46 = arith.addf %42, %45 : vector<16x128xf32>
    %cst_27 = arith.constant 0.000000e+00 : f32
    %47 = vector.broadcast %cst_27 : f32 to vector<16x128xf32>
    %48 = arith.maximumf %46, %47 : vector<16x128xf32>
    %49 = arith.truncf %48 : vector<16x128xf32> to vector<16x128xbf16>
    %cst_28 = arith.constant dense<0.000000e+00> : vector<16x384xf32>
    %50 = tpu.matmul %49, %9, %cst_28 {dimension_numbers = #tpu.dot_dimension_numbers<[1], [0], [0], [1], [0, 0, 1, 1], [], []>} : vector<16x128xbf16>, vector<128x384xbf16>, vector<16x384xf32> -> vector<16x384xf32>
    %51 = vector.broadcast %13 : vector<1x384xf32> to vector<16x384xf32>
    %52 = arith.addf %50, %51 : vector<16x384xf32>
    %53 = vector.extract_strided_slice %17 {offsets = [0, 128], sizes = [16, 384], strides = [1, 1]} : vector<16x512xf32> to vector<16x384xf32>
    %54 = vector.broadcast %14 : vector<1x384xf32> to vector<16x384xf32>
    %55 = arith.addf %53, %54 : vector<16x384xf32>
    %56 = vector.extract_strided_slice %52 {offsets = [0, 0], sizes = [16, 128], strides = [1, 1]} : vector<16x384xf32> to vector<16x128xf32>
    %57 = vector.extract_strided_slice %55 {offsets = [0, 0], sizes = [16, 128], strides = [1, 1]} : vector<16x384xf32> to vector<16x128xf32>
    %58 = arith.addf %56, %57 : vector<16x128xf32>
    %59 = arith.negf %58 : vector<16x128xf32>
    %60 = math.exp %59 : vector<16x128xf32>
    %cst_29 = arith.constant 1.000000e+00 : f32
    %61 = vector.broadcast %cst_29 : f32 to vector<16x128xf32>
    %62 = arith.addf %61, %60 : vector<16x128xf32>
    %63 = arith.divf %61, %62 : vector<16x128xf32>
    %64 = vector.extract_strided_slice %52 {offsets = [0, 128], sizes = [16, 128], strides = [1, 1]} : vector<16x384xf32> to vector<16x128xf32>
    %65 = vector.extract_strided_slice %55 {offsets = [0, 128], sizes = [16, 128], strides = [1, 1]} : vector<16x384xf32> to vector<16x128xf32>
    %66 = arith.addf %64, %65 : vector<16x128xf32>
    %67 = arith.negf %66 : vector<16x128xf32>
    %68 = math.exp %67 : vector<16x128xf32>
    %cst_30 = arith.constant 1.000000e+00 : f32
    %69 = vector.broadcast %cst_30 : f32 to vector<16x128xf32>
    %70 = arith.addf %69, %68 : vector<16x128xf32>
    %71 = arith.divf %69, %70 : vector<16x128xf32>
    %72 = vector.extract_strided_slice %52 {offsets = [0, 256], sizes = [16, 128], strides = [1, 1]} : vector<16x384xf32> to vector<16x128xf32>
    %73 = vector.extract_strided_slice %55 {offsets = [0, 256], sizes = [16, 128], strides = [1, 1]} : vector<16x384xf32> to vector<16x128xf32>
    %74 = arith.mulf %63, %73 : vector<16x128xf32>
    %75 = arith.addf %72, %74 : vector<16x128xf32>
    %76 = math.tanh %75 : vector<16x128xf32>
    %cst_31 = arith.constant 1.000000e+00 : f32
    %77 = vector.broadcast %cst_31 : f32 to vector<16x128xf32>
    %78 = arith.subf %77, %71 : vector<16x128xf32>
    %79 = arith.mulf %78, %76 : vector<16x128xf32>
    %80 = arith.mulf %71, %5 : vector<16x128xf32>
    %81 = arith.addf %79, %80 : vector<16x128xf32>
    %c0_32 = arith.constant 0 : index
    %c0_33 = arith.constant 0 : index
    %82 = vector.load %arg9[%c0_32, %c0_33] : memref<16x128xf32, #tpu.memory_space<vmem>>, vector<16x128xf32>
    tpu.vector_store %arg9[%c0_32, %c0_33], %81 {strides = array<i32>} : memref<16x128xf32, #tpu.memory_space<vmem>>, vector<16x128xf32>,
    %c0_34 = arith.constant 0 : index
    %c0_35 = arith.constant 0 : index
    %83 = vector.load %arg7[%c0_34, %c0_35] : memref<16x128xf32, #tpu.memory_space<vmem>>, vector<16x128xf32>
    tpu.vector_store %arg7[%c0_34, %c0_35], %81 {strides = array<i32>} : memref<16x128xf32, #tpu.memory_space<vmem>>, vector<16x128xf32>,
    %84 = arith.truncf %81 : vector<16x128xf32> to vector<16x128xbf16>
    %cst_36 = arith.constant dense<0.000000e+00> : vector<16x128xf32>
    %85 = tpu.matmul %84, %10, %cst_36 {dimension_numbers = #tpu.dot_dimension_numbers<[1], [0], [0], [1], [0, 0, 1, 1], [], []>} : vector<16x128xbf16>, vector<128x128xbf16>, vector<16x128xf32> -> vector<16x128xf32>
    %86 = vector.broadcast %15 : vector<1x128xf32> to vector<16x128xf32>
    %87 = arith.addf %85, %86 : vector<16x128xf32>
    %88 = tpu.iota {dimensions = array<i32: 1>} : vector<16x128xi32>
    %c64_i32 = arith.constant 64 : i32
    %89 = vector.broadcast %c64_i32 : i32 to vector<16x128xi32>
    %90 = arith.cmpi slt, %88, %89 : vector<16x128xi32>
    %cst_37 = arith.constant -1.000000e+30 : f32
    %91 = vector.broadcast %cst_37 : f32 to vector<16x128xf32>
    %92 = arith.select %90, %87, %91 : vector<16x128xi1>, vector<16x128xf32>
    %cst_38 = arith.constant dense<0xFF800000> : vector<16xf32>
    %93 = vector.multi_reduction <maximumf>, %92, %cst_38 [1] : vector<16x128xf32> to vector<16xf32>
    %94 = vector.shape_cast %93 : vector<16xf32> to vector<16x1xf32>
    %95 = vector.broadcast %94 : vector<16x1xf32> to vector<16x128xf32>
    %96 = arith.subf %92, %95 : vector<16x128xf32>
    %97 = math.exp %96 : vector<16x128xf32>
    %cst_39 = arith.constant dense<0.000000e+00> : vector<16xf32>
    %98 = vector.multi_reduction <add>, %97, %cst_39 [1] : vector<16x128xf32> to vector<16xf32>
    %99 = vector.shape_cast %98 : vector<16xf32> to vector<16x1xf32>
    %100 = math.log %99 : vector<16x1xf32>
    %101 = arith.addf %100, %94 : vector<16x1xf32>
    %102 = vector.broadcast %101 : vector<16x1xf32> to vector<16x128xf32>
    %103 = arith.subf %92, %102 : vector<16x128xf32>
    %c0_40 = arith.constant 0 : index
    %c0_41 = arith.constant 0 : index
    %c0_42 = arith.constant 0 : index
    %104 = vector.load %arg6[%c0_40, %c0_41, %c0_42] : memref<1x16x128xf32, #tpu.memory_space<vmem>>, vector<1x16x128xf32>
    %105 = vector.shape_cast %104 : vector<1x16x128xf32> to vector<16x128xf32>
    %106 = vector.shape_cast %103 : vector<16x128xf32> to vector<1x16x128xf32>
    tpu.vector_store %arg6[%c0_40, %c0_41, %c0_42], %106 {strides = array<i32>} : memref<1x16x128xf32, #tpu.memory_space<vmem>>, vector<1x16x128xf32>,
    return
  }
  func.func @transform_0(%arg0: i32) -> (i32, i32, i32) {
    %c0_i32 = arith.constant 0 : i32
    %c0_i32_0 = arith.constant 0 : i32
    %c0_i32_1 = arith.constant 0 : i32
    return %arg0, %c0_i32, %c0_i32_0 : i32, i32, i32
  }
  func.func @transform_1(%arg0: i32) -> (i32, i32) {
    %c0_i32 = arith.constant 0 : i32
    %c0_i32_0 = arith.constant 0 : i32
    %c0_i32_1 = arith.constant 0 : i32
    return %c0_i32, %c0_i32_0 : i32, i32
  }
  func.func @transform_2(%arg0: i32) -> (i32, i32) {
    %c0_i32 = arith.constant 0 : i32
    %c0_i32_0 = arith.constant 0 : i32
    %c0_i32_1 = arith.constant 0 : i32
    return %c0_i32, %c0_i32_0 : i32, i32
  }
  func.func @transform_3(%arg0: i32) -> (i32, i32) {
    %c0_i32 = arith.constant 0 : i32
    %c0_i32_0 = arith.constant 0 : i32
    %c0_i32_1 = arith.constant 0 : i32
    return %c0_i32, %c0_i32_0 : i32, i32
  }
  func.func @transform_4(%arg0: i32) -> (i32, i32) {
    %c0_i32 = arith.constant 0 : i32
    %c0_i32_0 = arith.constant 0 : i32
    %c0_i32_1 = arith.constant 0 : i32
    return %c0_i32, %c0_i32_0 : i32, i32
  }
  func.func @transform_5(%arg0: i32) -> (i32, i32, i32) {
    %c0_i32 = arith.constant 0 : i32
    %c0_i32_0 = arith.constant 0 : i32
    %c0_i32_1 = arith.constant 0 : i32
    return %arg0, %c0_i32, %c0_i32_0 : i32, i32, i32
  }
  func.func @transform_6(%arg0: i32) -> (i32, i32) {
    %c0_i32 = arith.constant 0 : i32
    %c0_i32_0 = arith.constant 0 : i32
    %c0_i32_1 = arith.constant 0 : i32
    return %c0_i32, %c0_i32_0 : i32, i32
  }
  func.func @transform_7(%arg0: i32) -> (i32, i32, i32) {
    %c0_i32 = arith.constant 0 : i32
    %c0_i32_0 = arith.constant 0 : i32
    %c0_i32_1 = arith.constant 0 : i32
    return %arg0, %c0_i32, %c0_i32_0 : i32, i32, i32
  }
}

</mosaic_0001>

<llo_original>
// kernel: decode.1
$region0: #{decode.1}
  #allocation0 [shape = 'u32[]', space=smem, size = 0x4, offset = 0x4, fixed_abs, tag = 'smem constant byte address 0x4 - core index']
  #allocation1 [shape = 'u32[72,128]{1,0:T(1,128)}', space=vmem, size = 0x9000, scoped, tag = 'internal scratch']
  #allocation2 [shape = 'f32[16,128]{1,0:T(8,128)}', space=vmem, size = 0x2000, scoped, tag = 'scratch operand']
  %s0 = inlined_call_operand.vmem [shape: bf16[1,16,128], index: 0, kind: input, shape index: {}]
  %s1 = inlined_call_operand.vmem [shape: f32[16,128], index: 1, kind: input, shape index: {}]
  %s2 = inlined_call_operand.vmem [shape: bf16[128,128], index: 2, kind: input, shape index: {}]
  %s3 = inlined_call_operand.hbm [shape: bf16[128,1280], index: 3, kind: input, shape index: {}]
  %s4 = inlined_call_operand.vmem [shape: f32[1,1152], index: 4, kind: input, shape index: {}]
  %s5 = inlined_call_operand.vmem [shape: f32[1,16,128], index: 5, kind: output, shape index: {0}]
  %s6 = inlined_call_operand.vmem [shape: f32[16,128], index: 6, kind: output, shape index: {1}]
  %s7 = inlined_call_operand.vmem [shape: f32[1,16,128], index: 7, kind: output, shape index: {2}]
  %8 = xla_tuple %s5, %s6, %s7
  %s9 = sld [smem:[#allocation0]]
  $region54: #{decode.1} parent=0
    _
  %s11 = ssub.s32 1, %s9
  %s12 = scalar_select 0, %s11, %s9
  $region1: #{decode.1} parent=0
    #allocation3 [shape = 'u8[327680]{0}', space=vmem, size = 0x50000, scoped, tag = 'input window, operand 3, single buffered']
    #allocation4 [shape = 's32[1]{0}', space=sflag, size = 0x4, scoped, tag = 'scoped memory for decode.1']
    %13 = vsyncpa [#allocation4], 0
    // Predicated region
    $region2: #{decode.1} parent=1 // pred_check
      _
    $region3: #{decode.1} parent=1 // pred_check_branch
      %15 = sbr.rel (0) target = $region5
    $region4: #{decode.1} parent=1 // pred_region
      _
    $region5: #{decode.1} parent=1 // pred_fallthru
      _
    // Predicated region
    $region6: #{decode.1} parent=1 // pred_check
      _
    $region7: #{decode.1} parent=1 // pred_check_branch
      %17 = sbr.rel (0) target = $region9
    $region8: #{decode.1} parent=1 // pred_region
      _
    $region9: #{decode.1} parent=1 // pred_fallthru
      _
    // Predicated region
    $region10: #{decode.1} parent=1 // pred_check
      _
    $region11: #{decode.1} parent=1 // pred_check_branch
      %19 = sbr.rel (0) target = $region13
    $region12: #{decode.1} parent=1 // pred_region
      _
    $region13: #{decode.1} parent=1 // pred_fallthru
      _
    // Predicated region
    $region14: #{decode.1} parent=1 // pred_check
      _
    $region15: #{decode.1} parent=1 // pred_check_branch
      %21 = sbr.rel (0) target = $region17
    $region16: #{decode.1} parent=1 // pred_region
      %23 = vsyncadd [#allocation4], 0
      %s24 = sshll.u32 %s3, 4
      %s25 = int_to_ptr.hbm [resolvable:$true] %s24
      %s26 = sshll.u32 [#allocation3], 4
      %s27 = int_to_ptr.vmem [resolvable:$true] %s26
      %32 = dma.hbm_to_vmem [thread:$0]  %s25, 10240, %s27, [#allocation4], 640, 640, 40
    $region17: #{decode.1} parent=1 // pred_fallthru
      _
    // Predicated region
    $region18: #{decode.1} parent=1 // pred_check
      _
    $region19: #{decode.1} parent=1 // pred_check_branch
      %34 = sbr.rel (0) target = $region21
    $region20: #{decode.1} parent=1 // pred_region
      _
    $region21: #{decode.1} parent=1 // pred_fallthru
      _
    // Predicated region
    $region22: #{decode.1} parent=1 // pred_check
      _
    $region23: #{decode.1} parent=1 // pred_check_branch
      %36 = sbr.rel (0) target = $region25
    $region24: #{decode.1} parent=1 // pred_region
      %38 = dma.done [#allocation4], 10240
    $region25: #{decode.1} parent=1 // pred_fallthru
      _
    %p39 = scmp.eq.s32.totalorder 0, 0
    // Predicated region
    $region26: #{decode.1} parent=1 // pred_check
      %p40 = pneg %p39
    $region27: #{decode.1} parent=1 // pred_check_branch
      %42 = sbr.rel (%p40) target = $region29
    $region28: #{decode.1} parent=1 // pred_region
      %v43 = vld [vmem:[%s1] sm:$0xff]
      %v44 = vld [vmem:[%s1 + $0x8] sm:$0xff]
      %45 = vst [vmem:[#allocation2] sm:$0xff] %v43
      %46 = vst [vmem:[#allocation2 + $0x8] sm:$0xff] %v44
    $region29: #{decode.1} parent=1 // pred_fallthru
      _
    %v47 = vld [vmem:[%s0] sm:$0xf]
    %v48 = vld [vmem:[%s0 + $0x4] sm:$0xf]
    %v49 = vld [vmem:[#allocation2] sm:$0xff]
    %v50 = vld [vmem:[#allocation2 + $0x8] sm:$0xff]
    %v51 = vpack.c.bf16 %v50, %v49
    %v52 = vld [vmem:[#allocation3] sm:$0xff]
    %v53 = vld [vmem:[#allocation3 + $0x28] sm:$0xff]
    %v54 = vld [vmem:[#allocation3 + $0x50] sm:$0xff]
    %v55 = vld [vmem:[#allocation3 + $0x78] sm:$0xff]
    %v56 = vld [vmem:[#allocation3 + $0xa0] sm:$0xff]
    %v57 = vld [vmem:[#allocation3 + $0xc8] sm:$0xff]
    %v58 = vld [vmem:[#allocation3 + $0xf0] sm:$0xff]
    %v59 = vld [vmem:[#allocation3 + $0x118] sm:$0xff]
    %v60 = vld [vmem:[#allocation3 + $0x140] sm:$0xff]
    %v61 = vld [vmem:[#allocation3 + $0x168] sm:$0xff]
    %v62 = vld [vmem:[#allocation3 + $0x190] sm:$0xff]
    %v63 = vld [vmem:[#allocation3 + $0x1b8] sm:$0xff]
    %v64 = vld [vmem:[#allocation3 + $0x1e0] sm:$0xff]
    %v65 = vld [vmem:[#allocation3 + $0x208] sm:$0xff]
    %v66 = vld [vmem:[#allocation3 + $0x230] sm:$0xff]
    %v67 = vld [vmem:[#allocation3 + $0x258] sm:$0xff]
    %v68 = vld [vmem:[#allocation3 + $0x8] sm:$0xff]
    %v69 = vld [vmem:[#allocation3 + $0x10] sm:$0xff]
    %v70 = vld [vmem:[#allocation3 + $0x30] sm:$0xff]
    %v71 = vld [vmem:[#allocation3 + $0x38] sm:$0xff]
    %v72 = vld [vmem:[#allocation3 + $0x58] sm:$0xff]
    %v73 = vld [vmem:[#allocation3 + $0x60] sm:$0xff]
    %v74 = vld [vmem:[#allocation3 + $0x80] sm:$0xff]
    %v75 = vld [vmem:[#allocation3 + $0x88] sm:$0xff]
    %v76 = vld [vmem:[#allocation3 + $0xa8] sm:$0xff]
    %v77 = vld [vmem:[#allocation3 + $0xb0] sm:$0xff]
    %v78 = vld [vmem:[#allocation3 + $0xd0] sm:$0xff]
    %v79 = vld [vmem:[#allocation3 + $0xd8] sm:$0xff]
    %v80 = vld [vmem:[#allocation3 + $0xf8] sm:$0xff]
    %v81 = vld [vmem:[#allocation3 + $0x100] sm:$0xff]
    %v82 = vld [vmem:[#allocation3 + $0x120] sm:$0xff]
    %v83 = vld [vmem:[#allocation3 + $0x128] sm:$0xff]
    %v84 = vld [vmem:[#allocation3 + $0x148] sm:$0xff]
    %v85 = vld [vmem:[#allocation3 + $0x150] sm:$0xff]
    %v86 = vld [vmem:[#allocation3 + $0x170] sm:$0xff]
    %v87 = vld [vmem:[#allocation3 + $0x178] sm:$0xff]
    %v88 = vld [vmem:[#allocation3 + $0x198] sm:$0xff]
    %v89 = vld [vmem:[#allocation3 + $0x1a0] sm:$0xff]
    %v90 = vld [vmem:[#allocation3 + $0x1c0] sm:$0xff]
    %v91 = vld [vmem:[#allocation3 + $0x1c8] sm:$0xff]
    %v92 = vld [vmem:[#allocation3 + $0x1e8] sm:$0xff]
    %v93 = vld [vmem:[#allocation3 + $0x1f0] sm:$0xff]
    %v94 = vld [vmem:[#allocation3 + $0x210] sm:$0xff]
    %v95 = vld [vmem:[#allocation3 + $0x218] sm:$0xff]
    %v96 = vld [vmem:[#allocation3 + $0x238] sm:$0xff]
    %v97 = vld [vmem:[#allocation3 + $0x240] sm:$0xff]
    %v98 = vld [vmem:[#allocation3 + $0x260] sm:$0xff]
    %v99 = vld [vmem:[#allocation3 + $0x268] sm:$0xff]
    %v100 = vld [vmem:[#allocation3 + $0x18] sm:$0xff]
    %v101 = vld [vmem:[#allocation3 + $0x20] sm:$0xf]
    %v102 = vld [vmem:[#allocation3 + $0x40] sm:$0xff]
    %v103 = vld [vmem:[#allocation3 + $0x48] sm:$0xf]
    %v104 = vld [vmem:[#allocation3 + $0x68] sm:$0xff]
    %v105 = vld [vmem:[#allocation3 + $0x70] sm:$0xf]
    %v106 = vld [vmem:[#allocation3 + $0x90] sm:$0xff]
    %v107 = vld [vmem:[#allocation3 + $0x98] sm:$0xf]
    %v108 = vld [vmem:[#allocation3 + $0xb8] sm:$0xff]
    %v109 = vld [vmem:[#allocation3 + $0xc0] sm:$0xf]
    %v110 = vld [vmem:[#allocation3 + $0xe0] sm:$0xff]
    %v111 = vld [vmem:[#allocation3 + $0xe8] sm:$0xf]
    %v112 = vld [vmem:[#allocation3 + $0x108] sm:$0xff]
    %v113 = vld [vmem:[#allocation3 + $0x110] sm:$0xf]
    %v114 = vld [vmem:[#allocation3 + $0x130] sm:$0xff]
    %v115 = vld [vmem:[#allocation3 + $0x138] sm:$0xf]
    %v116 = vld [vmem:[#allocation3 + $0x158] sm:$0xff]
    %v117 = vld [vmem:[#allocation3 + $0x160] sm:$0xf]
    %v118 = vld [vmem:[#allocation3 + $0x180] sm:$0xff]
    %v119 = vld [vmem:[#allocation3 + $0x188] sm:$0xf]
    %v120 = vld [vmem:[#allocation3 + $0x1a8] sm:$0xff]
    %v121 = vld [vmem:[#allocation3 + $0x1b0] sm:$0xf]
    %v122 = vld [vmem:[#allocation3 + $0x1d0] sm:$0xff]
    %v123 = vld [vmem:[#allocation3 + $0x1d8] sm:$0xf]
    %v124 = vld [vmem:[#allocation3 + $0x1f8] sm:$0xff]
    %v125 = vld [vmem:[#allocation3 + $0x200] sm:$0xf]
    %v126 = vld [vmem:[#allocation3 + $0x220] sm:$0xff]
    %v127 = vld [vmem:[#allocation3 + $0x228] sm:$0xf]
    %v128 = vld [vmem:[#allocation3 + $0x248] sm:$0xff]
    %v129 = vld [vmem:[#allocation3 + $0x250] sm:$0xf]
    %v130 = vld [vmem:[#allocation3 + $0x270] sm:$0xff]
    %v131 = vld [vmem:[#allocation3 + $0x278] sm:$0xf]
    %v132 = vld [vmem:[#allocation3 + $0x24] sm:$0xf]
    %v133 = vld [vmem:[#allocation3 + $0x4c] sm:$0xf]
    %v134 = vld [vmem:[#allocation3 + $0x74] sm:$0xf]
    %v135 = vld [vmem:[#allocation3 + $0x9c] sm:$0xf]
    %v136 = vld [vmem:[#allocation3 + $0xc4] sm:$0xf]
    %v137 = vld [vmem:[#allocation3 + $0xec] sm:$0xf]
    %v138 = vld [vmem:[#allocation3 + $0x114] sm:$0xf]
    %v139 = vld [vmem:[#allocation3 + $0x13c] sm:$0xf]
    %v140 = vld [vmem:[#allocation3 + $0x164] sm:$0xf]
    %v141 = vld [vmem:[#allocation3 + $0x18c] sm:$0xf]
    %v142 = vld [vmem:[#allocation3 + $0x1b4] sm:$0xf]
    %v143 = vld [vmem:[#allocation3 + $0x1dc] sm:$0xf]
    %v144 = vld [vmem:[#allocation3 + $0x204] sm:$0xf]
    %v145 = vld [vmem:[#allocation3 + $0x22c] sm:$0xf]
    %v146 = vld [vmem:[#allocation3 + $0x254] sm:$0xf]
    %v147 = vld [vmem:[#allocation3 + $0x27c] sm:$0xf]
    %v148 = vld [vmem:[%s4] sm:$0x1]
    %v149 = vld [vmem:[%s4 + $0x1] sm:$0x1]
    %v150 = vld [vmem:[%s4 + $0x2] sm:$0x7]
    %v151 = vld [vmem:[%s4 + $0x5] sm:$0x7]
    %v152 = vld [vmem:[%s4 + $0x8] sm:$0x1]
    %v155 = vunpack.c.l.b16 %v47
    %v156 = vunpack.c.l.b16 %v48
    %v157 = vpack.c.b16 %v156, %v155
    %v175 = vunpack.c.l.b16 %v52
    %v176 = vunpack.c.h.b16 %v52
    %v177 = vunpack.c.l.b16 %v53
    %v178 = vunpack.c.h.b16 %v53
    %v179 = vunpack.c.l.b16 %v54
    %v180 = vunpack.c.h.b16 %v54
    %v181 = vunpack.c.l.b16 %v55
    %v182 = vunpack.c.h.b16 %v55
    %v183 = vunpack.c.l.b16 %v56
    %v184 = vunpack.c.h.b16 %v56
    %v185 = vunpack.c.l.b16 %v57
    %v186 = vunpack.c.h.b16 %v57
    %v187 = vunpack.c.l.b16 %v58
    %v188 = vunpack.c.h.b16 %v58
    %v189 = vunpack.c.l.b16 %v59
    %v190 = vunpack.c.h.b16 %v59
    %v191 = vunpack.c.l.b16 %v60
    %v192 = vunpack.c.h.b16 %v60
    %v193 = vunpack.c.l.b16 %v61
    %v194 = vunpack.c.h.b16 %v61
    %v195 = vunpack.c.l.b16 %v62
    %v196 = vunpack.c.h.b16 %v62
    %v197 = vunpack.c.l.b16 %v63
    %v198 = vunpack.c.h.b16 %v63
    %v199 = vunpack.c.l.b16 %v64
    %v200 = vunpack.c.h.b16 %v64
    %v201 = vunpack.c.l.b16 %v65
    %v202 = vunpack.c.h.b16 %v65
    %v203 = vunpack.c.l.b16 %v66
    %v204 = vunpack.c.h.b16 %v66
    %v205 = vunpack.c.l.b16 %v67
    %v206 = vunpack.c.h.b16 %v67
    %v207 = vpack.c.b16 %v177, %v175
    %v208 = vpack.c.b16 %v178, %v176
    %v209 = vpack.c.b16 %v181, %v179
    %v210 = vpack.c.b16 %v182, %v180
    %v211 = vpack.c.b16 %v185, %v183
    %v212 = vpack.c.b16 %v186, %v184
    %v213 = vpack.c.b16 %v189, %v187
    %v214 = vpack.c.b16 %v190, %v188
    %v215 = vpack.c.b16 %v193, %v191
    %v216 = vpack.c.b16 %v194, %v192
    %v217 = vpack.c.b16 %v197, %v195
    %v218 = vpack.c.b16 %v198, %v196
    %v219 = vpack.c.b16 %v201, %v199
    %v220 = vpack.c.b16 %v202, %v200
    %v221 = vpack.c.b16 %v205, %v203
    %v222 = vpack.c.b16 %v206, %v204
    %239 = vmatpush.bf16.msra.mxu0 %v221
    %240 = vmatpush.bf16.msra.mxu0 %v219
    %241 = vmatpush.bf16.msra.mxu0 %v217
    %242 = vmatpush.bf16.msra.mxu0 %v215
    %243 = vmatpush.bf16.msra.mxu0 %v213
    %244 = vmatpush.bf16.msra.mxu0 %v211
    %245 = vmatpush.bf16.msra.mxu0 %v209
    %246 = vmatpush.bf16.msra.mxu0 %v207
    %247 = vmatmul.bf16.gmra.mxu0 %v157
    %v248 = vpop.f32.mrf.mxu0
    %v249 = vadd.f32 0.0, %v248
    %v250 = vpop.f32.mrf.mxu0
    %v251 = vadd.f32 0.0, %v250
    %252 = vdwg.mxu0
    %253 = vmatpush.bf16.msra.mxu0 %v222
    %254 = vmatpush.bf16.msra.mxu0 %v220
    %255 = vmatpush.bf16.msra.mxu0 %v218
    %256 = vmatpush.bf16.msra.mxu0 %v216
    %257 = vmatpush.bf16.msra.mxu0 %v214
    %258 = vmatpush.bf16.msra.mxu0 %v212
    %259 = vmatpush.bf16.msra.mxu0 %v210
    %260 = vmatpush.bf16.msra.mxu0 %v208
    %261 = vmatmul.bf16.gmra.mxu0 %v157
    %v262 = vpop.f32.mrf.mxu0
    %v263 = vadd.f32 0.0, %v262
    %v264 = vpop.f32.mrf.mxu0
    %v265 = vadd.f32 0.0, %v264
    %266 = vdwg.mxu0
    %v299 = vunpack.c.l.b16 %v68
    %v300 = vunpack.c.h.b16 %v68
    %v301 = vunpack.c.l.b16 %v69
    %v302 = vunpack.c.h.b16 %v69
    %v303 = vunpack.c.l.b16 %v70
    %v304 = vunpack.c.h.b16 %v70
    %v305 = vunpack.c.l.b16 %v71
    %v306 = vunpack.c.h.b16 %v71
    %v307 = vunpack.c.l.b16 %v72
    %v308 = vunpack.c.h.b16 %v72
    %v309 = vunpack.c.l.b16 %v73
    %v310 = vunpack.c.h.b16 %v73
    %v311 = vunpack.c.l.b16 %v74
    %v312 = vunpack.c.h.b16 %v74
    %v313 = vunpack.c.l.b16 %v75
    %v314 = vunpack.c.h.b16 %v75
    %v315 = vunpack.c.l.b16 %v76
    %v316 = vunpack.c.h.b16 %v76
    %v317 = vunpack.c.l.b16 %v77
    %v318 = vunpack.c.h.b16 %v77
    %v319 = vunpack.c.l.b16 %v78
    %v320 = vunpack.c.h.b16 %v78
    %v321 = vunpack.c.l.b16 %v79
    %v322 = vunpack.c.h.b16 %v79
    %v323 = vunpack.c.l.b16 %v80
    %v324 = vunpack.c.h.b16 %v80
    %v325 = vunpack.c.l.b16 %v81
    %v326 = vunpack.c.h.b16 %v81
    %v327 = vunpack.c.l.b16 %v82
    %v328 = vunpack.c.h.b16 %v82
    %v329 = vunpack.c.l.b16 %v83
    %v330 = vunpack.c.h.b16 %v83
    %v331 = vunpack.c.l.b16 %v84
    %v332 = vunpack.c.h.b16 %v84
    %v333 = vunpack.c.l.b16 %v85
    %v334 = vunpack.c.h.b16 %v85
    %v335 = vunpack.c.l.b16 %v86
    %v336 = vunpack.c.h.b16 %v86
    %v337 = vunpack.c.l.b16 %v87
    %v338 = vunpack.c.h.b16 %v87
    %v339 = vunpack.c.l.b16 %v88
    %v340 = vunpack.c.h.b16 %v88
    %v341 = vunpack.c.l.b16 %v89
    %v342 = vunpack.c.h.b16 %v89
    %v343 = vunpack.c.l.b16 %v90
    %v344 = vunpack.c.h.b16 %v90
    %v345 = vunpack.c.l.b16 %v91
    %v346 = vunpack.c.h.b16 %v91
    %v347 = vunpack.c.l.b16 %v92
    %v348 = vunpack.c.h.b16 %v92
    %v349 = vunpack.c.l.b16 %v93
    %v350 = vunpack.c.h.b16 %v93
    %v351 = vunpack.c.l.b16 %v94
    %v352 = vunpack.c.h.b16 %v94
    %v353 = vunpack.c.l.b16 %v95
    %v354 = vunpack.c.h.b16 %v95
    %v355 = vunpack.c.l.b16 %v96
    %v356 = vunpack.c.h.b16 %v96
    %v357 = vunpack.c.l.b16 %v97
    %v358 = vunpack.c.h.b16 %v97
    %v359 = vunpack.c.l.b16 %v98
    %v360 = vunpack.c.h.b16 %v98
    %v361 = vunpack.c.l.b16 %v99
    %v362 = vunpack.c.h.b16 %v99
    %v363 = vpack.c.b16 %v303, %v299
    %v364 = vpack.c.b16 %v304, %v300
    %v365 = vpack.c.b16 %v305, %v301
    %v366 = vpack.c.b16 %v306, %v302
    %v367 = vpack.c.b16 %v311, %v307
    %v368 = vpack.c.b16 %v312, %v308
    %v369 = vpack.c.b16 %v313, %v309
    %v370 = vpack.c.b16 %v314, %v310
    %v371 = vpack.c.b16 %v319, %v315
    %v372 = vpack.c.b16 %v320, %v316
    %v373 = vpack.c.b16 %v321, %v317
    %v374 = vpack.c.b16 %v322, %v318
    %v375 = vpack.c.b16 %v327, %v323
    %v376 = vpack.c.b16 %v328, %v324
    %v377 = vpack.c.b16 %v329, %v325
    %v378 = vpack.c.b16 %v330, %v326
    %v379 = vpack.c.b16 %v335, %v331
    %v380 = vpack.c.b16 %v336, %v332
    %v381 = vpack.c.b16 %v337, %v333
    %v382 = vpack.c.b16 %v338, %v334
    %v383 = vpack.c.b16 %v343, %v339
    %v384 = vpack.c.b16 %v344, %v340
    %v385 = vpack.c.b16 %v345, %v341
    %v386 = vpack.c.b16 %v346, %v342
    %v387 = vpack.c.b16 %v351, %v347
    %v388 = vpack.c.b16 %v352, %v348
    %v389 = vpack.c.b16 %v353, %v349
    %v390 = vpack.c.b16 %v354, %v350
    %v391 = vpack.c.b16 %v359, %v355
    %v392 = vpack.c.b16 %v360, %v356
    %v393 = vpack.c.b16 %v361, %v357
    %v394 = vpack.c.b16 %v362, %v358
    %427 = vmatpush.bf16.msra.mxu0 %v391
    %428 = vmatpush.bf16.msra.mxu0 %v387
    %429 = vmatpush.bf16.msra.mxu0 %v383
    %430 = vmatpush.bf16.msra.mxu0 %v379
    %431 = vmatpush.bf16.msra.mxu0 %v375
    %432 = vmatpush.bf16.msra.mxu0 %v371
    %433 = vmatpush.bf16.msra.mxu0 %v367
    %434 = vmatpush.bf16.msra.mxu0 %v363
    %435 = vmatmul.bf16.gmra.mxu0 %v51
    %v436 = vpop.f32.mrf.mxu0
    %v437 = vadd.f32 0.0, %v436
    %v438 = vpop.f32.mrf.mxu0
    %v439 = vadd.f32 0.0, %v438
    %440 = vdwg.mxu0
    %441 = vmatpush.bf16.msra.mxu0 %v392
    %442 = vmatpush.bf16.msra.mxu0 %v388
    %443 = vmatpush.bf16.msra.mxu0 %v384
    %444 = vmatpush.bf16.msra.mxu0 %v380
    %445 = vmatpush.bf16.msra.mxu0 %v376
    %446 = vmatpush.bf16.msra.mxu0 %v372
    %447 = vmatpush.bf16.msra.mxu0 %v368
    %448 = vmatpush.bf16.msra.mxu0 %v364
    %449 = vmatmul.bf16.gmra.mxu0 %v51
    %v450 = vpop.f32.mrf.mxu0
    %v451 = vadd.f32 0.0, %v450
    %v452 = vpop.f32.mrf.mxu0
    %v453 = vadd.f32 0.0, %v452
    %454 = vdwg.mxu0
    %455 = vmatpush.bf16.msra.mxu0 %v393
    %456 = vmatpush.bf16.msra.mxu0 %v389
    %457 = vmatpush.bf16.msra.mxu0 %v385
    %458 = vmatpush.bf16.msra.mxu0 %v381
    %459 = vmatpush.bf16.msra.mxu0 %v377
    %460 = vmatpush.bf16.msra.mxu0 %v373
    %461 = vmatpush.bf16.msra.mxu0 %v369
    %462 = vmatpush.bf16.msra.mxu0 %v365
    %463 = vmatmul.bf16.gmra.mxu0 %v51
    %v464 = vpop.f32.mrf.mxu0
    %v465 = vadd.f32 0.0, %v464
    %v466 = vpop.f32.mrf.mxu0
    %v467 = vadd.f32 0.0, %v466
    %468 = vdwg.mxu0
    %469 = vmatpush.bf16.msra.mxu0 %v394
    %470 = vmatpush.bf16.msra.mxu0 %v390
    %471 = vmatpush.bf16.msra.mxu0 %v386
    %472 = vmatpush.bf16.msra.mxu0 %v382
    %473 = vmatpush.bf16.msra.mxu0 %v378
    %474 = vmatpush.bf16.msra.mxu0 %v374
    %475 = vmatpush.bf16.msra.mxu0 %v370
    %476 = vmatpush.bf16.msra.mxu0 %v366
    %477 = vmatmul.bf16.gmra.mxu0 %v51
    %v478 = vpop.f32.mrf.mxu0
    %v479 = vadd.f32 0.0, %v478
    %v480 = vpop.f32.mrf.mxu0
    %v481 = vadd.f32 0.0, %v480
    %482 = vdwg.mxu0
    %v483 = vadd.f32 %v249, %v437
    %v484 = vadd.f32 %v251, %v439
    %v486 = vperm.slane %v148, 0
    %v488 = vadd.f32 %v483, %v486
    %v489 = vadd.f32 %v484, %v486
    %v490 = vlaneseq
    %v491 = vand.u32 %v490, 127
    %vm492 = vcmp.lt.s32.totalorder %v491, 8
    %v493 = vsel %vm492, %v488, -1e+30
    %v494 = vsel %vm492, %v489, -1e+30
    %495 = vmax.xlane.f32.xlu0 %v493
    %v496 = vpop.xlane.xlu0 %495
    %497 = vmax.xlane.f32.xlu0 %v494
    %v498 = vpop.xlane.xlu0 %497
    %v499 = vsub.f32 %v493, %v496
    %v500 = vsub.f32 %v494, %v498
    %v501 = vmul.f32 %v499, 1.442695
    %v502 = vpow.pop %v501
    %v503 = vmul.f32 %v500, 1.442695
    %v504 = vpow.pop %v503
    %505 = vadd.xlane.f32.xlu0 %v502
    %v506 = vpop.xlane.xlu0 %505
    %507 = vadd.xlane.f32.xlu0 %v504
    %v508 = vpop.xlane.xlu0 %507
    %v509 = vrcp.pop %v506
    %v510 = vmul.f32 %v506, %v509
    %v511 = vsub.f32 1.0, %v510
    %v512 = vmul.f32 %v509, %v511
    %v513 = vadd.f32 %v509, %v512
    %vm514 = vweird.f32 %v506
    %vm515 = vweird.f32 %v509
    %vm516 = vmor %vm514, %vm515
    %v517 = vsel %vm516, %v509, %v513
    %v518 = vand.u32 2147483647, %v506
    %vm519 = vcmp.eq.f32.partialorder %v518, 8.507059e+37
    %v520 = vand.u32 %v506, 2147483648
    %v521 = vor.u32 1.1754944e-38, %v520
    %v522 = vsel %vm519, %v521, %v517
    %v523 = vmul.f32 %v502, %v522
    %v524 = vrcp.pop %v508
    %v525 = vmul.f32 %v508, %v524
    %v526 = vsub.f32 1.0, %v525
    %v527 = vmul.f32 %v524, %v526
    %v528 = vadd.f32 %v524, %v527
    %vm529 = vweird.f32 %v508
    %vm530 = vweird.f32 %v524
    %vm531 = vmor %vm529, %vm530
    %v532 = vsel %vm531, %v524, %v528
    %v533 = vand.u32 2147483647, %v508
    %vm534 = vcmp.eq.f32.partialorder %v533, 8.507059e+37
    %v535 = vand.u32 %v508, 2147483648
    %v536 = vor.u32 1.1754944e-38, %v535
    %v537 = vsel %vm534, %v536, %v532
    %v538 = vmul.f32 %v504, %v537
    %539 = vst [vmem:[%s7] sm:$0xff] %v523
    %540 = vst [vmem:[%s7 + $0x8] sm:$0xff] %v538
    %v542 = vperm.slane %v149, 0
    %v544 = vadd.f32 %v263, %v542
    %v545 = vadd.f32 %v265, %v542
    %v546 = vpack.c.bf16 %v538, %v523
    %v547 = vld [vmem:[%s2] sm:$0xf]
    %v548 = vld [vmem:[%s2 + $0x4] sm:$0xf]
    %v549 = vld [vmem:[%s2 + $0x8] sm:$0xf]
    %v550 = vld [vmem:[%s2 + $0xc] sm:$0xf]
    %v551 = vld [vmem:[%s2 + $0x10] sm:$0xf]
    %v552 = vld [vmem:[%s2 + $0x14] sm:$0xf]
    %v553 = vld [vmem:[%s2 + $0x18] sm:$0xf]
    %v554 = vld [vmem:[%s2 + $0x1c] sm:$0xf]
    %v555 = vld [vmem:[%s2 + $0x20] sm:$0xf]
    %v556 = vld [vmem:[%s2 + $0x24] sm:$0xf]
    %v557 = vld [vmem:[%s2 + $0x28] sm:$0xf]
    %v558 = vld [vmem:[%s2 + $0x2c] sm:$0xf]
    %v559 = vld [vmem:[%s2 + $0x30] sm:$0xf]
    %v560 = vld [vmem:[%s2 + $0x34] sm:$0xf]
    %v561 = vld [vmem:[%s2 + $0x38] sm:$0xf]
    %v562 = vld [vmem:[%s2 + $0x3c] sm:$0xf]
    %v579 = vunpack.c.l.b16 %v547
    %v580 = vunpack.c.l.b16 %v548
    %v581 = vunpack.c.l.b16 %v549
    %v582 = vunpack.c.l.b16 %v550
    %v583 = vunpack.c.l.b16 %v551
    %v584 = vunpack.c.l.b16 %v552
    %v585 = vunpack.c.l.b16 %v553
    %v586 = vunpack.c.l.b16 %v554
    %v587 = vunpack.c.l.b16 %v555
    %v588 = vunpack.c.l.b16 %v556
    %v589 = vunpack.c.l.b16 %v557
    %v590 = vunpack.c.l.b16 %v558
    %v591 = vunpack.c.l.b16 %v559
    %v592 = vunpack.c.l.b16 %v560
    %v593 = vunpack.c.l.b16 %v561
    %v594 = vunpack.c.l.b16 %v562
    %v595 = vpack.c.b16 %v580, %v579
    %v596 = vpack.c.b16 %v582, %v581
    %v597 = vpack.c.b16 %v584, %v583
    %v598 = vpack.c.b16 %v586, %v585
    %v599 = vpack.c.b16 %v588, %v587
    %v600 = vpack.c.b16 %v590, %v589
    %v601 = vpack.c.b16 %v592, %v591
    %v602 = vpack.c.b16 %v594, %v593
    %611 = vmatpush.bf16.msra.mxu0 %v602
    %612 = vmatpush.bf16.msra.mxu0 %v601
    %613 = vmatpush.bf16.msra.mxu0 %v600
    %614 = vmatpush.bf16.msra.mxu0 %v599
    %615 = vmatpush.bf16.msra.mxu0 %v598
    %616 = vmatpush.bf16.msra.mxu0 %v597
    %617 = vmatpush.bf16.msra.mxu0 %v596
    %618 = vmatpush.bf16.msra.mxu0 %v595
    %619 = vmatmul.bf16.gmra.mxu0 %v546
    %v620 = vpop.f32.mrf.mxu0
    %v621 = vadd.f32 0.0, %v620
    %v622 = vpop.f32.mrf.mxu0
    %v623 = vadd.f32 0.0, %v622
    %624 = vdwg.mxu0
    %v625 = vadd.f32 %v544, %v621
    %v626 = vadd.f32 %v545, %v623
    %v627 = vmax.f32 %v625, 0.0
    %v628 = vmax.f32 %v626, 0.0
    %v629 = vpack.c.bf16 %v628, %v627
    %v631 = vperm.slane %v150, 0
    %v632 = vperm.slane %v150, 1
    %v633 = vperm.slane %v150, 2
    %v669 = vunpack.c.l.b16 %v100
    %v670 = vunpack.c.h.b16 %v100
    %v671 = vunpack.c.l.b16 %v101
    %v672 = vunpack.c.l.b16 %v102
    %v673 = vunpack.c.h.b16 %v102
    %v674 = vunpack.c.l.b16 %v103
    %v675 = vunpack.c.l.b16 %v104
    %v676 = vunpack.c.h.b16 %v104
    %v677 = vunpack.c.l.b16 %v105
    %v678 = vunpack.c.l.b16 %v106
    %v679 = vunpack.c.h.b16 %v106
    %v680 = vunpack.c.l.b16 %v107
    %v681 = vunpack.c.l.b16 %v108
    %v682 = vunpack.c.h.b16 %v108
    %v683 = vunpack.c.l.b16 %v109
    %v684 = vunpack.c.l.b16 %v110
    %v685 = vunpack.c.h.b16 %v110
    %v686 = vunpack.c.l.b16 %v111
    %v687 = vunpack.c.l.b16 %v112
    %v688 = vunpack.c.h.b16 %v112
    %v689 = vunpack.c.l.b16 %v113
    %v690 = vunpack.c.l.b16 %v114
    %v691 = vunpack.c.h.b16 %v114
    %v692 = vunpack.c.l.b16 %v115
    %v693 = vunpack.c.l.b16 %v116
    %v694 = vunpack.c.h.b16 %v116
    %v695 = vunpack.c.l.b16 %v117
    %v696 = vunpack.c.l.b16 %v118
    %v697 = vunpack.c.h.b16 %v118
    %v698 = vunpack.c.l.b16 %v119
    %v699 = vunpack.c.l.b16 %v120
    %v700 = vunpack.c.h.b16 %v120
    %v701 = vunpack.c.l.b16 %v121
    %v702 = vunpack.c.l.b16 %v122
    %v703 = vunpack.c.h.b16 %v122
    %v704 = vunpack.c.l.b16 %v123
    %v705 = vunpack.c.l.b16 %v124
    %v706 = vunpack.c.h.b16 %v124
    %v707 = vunpack.c.l.b16 %v125
    %v708 = vunpack.c.l.b16 %v126
    %v709 = vunpack.c.h.b16 %v126
    %v710 = vunpack.c.l.b16 %v127
    %v711 = vunpack.c.l.b16 %v128
    %v712 = vunpack.c.h.b16 %v128
    %v713 = vunpack.c.l.b16 %v129
    %v714 = vunpack.c.l.b16 %v130
    %v715 = vunpack.c.h.b16 %v130
    %v716 = vunpack.c.l.b16 %v131
    %v717 = vpack.c.b16 %v672, %v669
    %v718 = vpack.c.b16 %v673, %v670
    %v719 = vpack.c.b16 %v674, %v671
    %v720 = vpack.c.b16 %v678, %v675
    %v721 = vpack.c.b16 %v679, %v676
    %v722 = vpack.c.b16 %v680, %v677
    %v723 = vpack.c.b16 %v684, %v681
    %v724 = vpack.c.b16 %v685, %v682
    %v725 = vpack.c.b16 %v686, %v683
    %v726 = vpack.c.b16 %v690, %v687
    %v727 = vpack.c.b16 %v691, %v688
    %v728 = vpack.c.b16 %v692, %v689
    %v729 = vpack.c.b16 %v696, %v693
    %v730 = vpack.c.b16 %v697, %v694
    %v731 = vpack.c.b16 %v698, %v695
    %v732 = vpack.c.b16 %v702, %v699
    %v733 = vpack.c.b16 %v703, %v700
    %v734 = vpack.c.b16 %v704, %v701
    %v735 = vpack.c.b16 %v708, %v705
    %v736 = vpack.c.b16 %v709, %v706
    %v737 = vpack.c.b16 %v710, %v707
    %v738 = vpack.c.b16 %v714, %v711
    %v739 = vpack.c.b16 %v715, %v712
    %v740 = vpack.c.b16 %v716, %v713
    %765 = vmatpush.bf16.msra.mxu0 %v738
    %766 = vmatpush.bf16.msra.mxu0 %v735
    %767 = vmatpush.bf16.msra.mxu0 %v732
    %768 = vmatpush.bf16.msra.mxu0 %v729
    %769 = vmatpush.bf16.msra.mxu0 %v726
    %770 = vmatpush.bf16.msra.mxu0 %v723
    %771 = vmatpush.bf16.msra.mxu0 %v720
    %772 = vmatpush.bf16.msra.mxu0 %v717
    %773 = vmatmul.bf16.gmra.mxu0 %v629
    %v774 = vpop.f32.mrf.mxu0
    %v775 = vadd.f32 %v631, %v774
    %v776 = vpop.f32.mrf.mxu0
    %v777 = vadd.f32 %v631, %v776
    %778 = vdwg.mxu0
    %779 = vmatpush.bf16.msra.mxu0 %v739
    %780 = vmatpush.bf16.msra.mxu0 %v736
    %781 = vmatpush.bf16.msra.mxu0 %v733
    %782 = vmatpush.bf16.msra.mxu0 %v730
    %783 = vmatpush.bf16.msra.mxu0 %v727
    %784 = vmatpush.bf16.msra.mxu0 %v724
    %785 = vmatpush.bf16.msra.mxu0 %v721
    %786 = vmatpush.bf16.msra.mxu0 %v718
    %787 = vmatmul.bf16.gmra.mxu0 %v629
    %v788 = vpop.f32.mrf.mxu0
    %v789 = vadd.f32 %v632, %v788
    %v790 = vpop.f32.mrf.mxu0
    %v791 = vadd.f32 %v632, %v790
    %792 = vdwg.mxu0
    %793 = vmatpush.bf16.msra.mxu0 %v740
    %794 = vmatpush.bf16.msra.mxu0 %v737
    %795 = vmatpush.bf16.msra.mxu0 %v734
    %796 = vmatpush.bf16.msra.mxu0 %v731
    %797 = vmatpush.bf16.msra.mxu0 %v728
    %798 = vmatpush.bf16.msra.mxu0 %v725
    %799 = vmatpush.bf16.msra.mxu0 %v722
    %800 = vmatpush.bf16.msra.mxu0 %v719
    %801 = vmatmul.bf16.gmra.mxu0 %v629
    %v802 = vpop.f32.mrf.mxu0
    %v803 = vadd.f32 %v633, %v802
    %v804 = vpop.f32.mrf.mxu0
    %v805 = vadd.f32 %v633, %v804
    %806 = vdwg.mxu0
    %v808 = vperm.slane %v151, 0
    %v809 = vperm.slane %v151, 1
    %v810 = vperm.slane %v151, 2
    %v814 = vadd.f32 %v451, %v808
    %v815 = vadd.f32 %v465, %v809
    %v816 = vadd.f32 %v479, %v810
    %v817 = vadd.f32 %v453, %v808
    %v818 = vadd.f32 %v467, %v809
    %v819 = vadd.f32 %v481, %v810
    %v820 = vadd.f32 %v775, %v814
    %v821 = vadd.f32 %v777, %v817
    %v822 = vxor.u32 %v820, 2147483648
    %v823 = vxor.u32 %v821, 2147483648
    %v824 = vmul.f32 %v822, 1.442695
    %v825 = vpow.pop %v824
    %v826 = vmul.f32 %v823, 1.442695
    %v827 = vpow.pop %v826
    %v828 = vadd.f32 %v825, 1.0
    %v829 = vadd.f32 %v827, 1.0
    %v830 = vrcp.pop %v828
    %v831 = vmul.f32 %v828, %v830
    %v832 = vsub.f32 1.0, %v831
    %v833 = vmul.f32 %v830, %v832
    %v834 = vadd.f32 %v830, %v833
    %vm835 = vweird.f32 %v828
    %vm836 = vweird.f32 %v830
    %vm837 = vmor %vm835, %vm836
    %v838 = vsel %vm837, %v830, %v834
    %v839 = vand.u32 2147483647, %v828
    %vm840 = vcmp.eq.f32.partialorder %v839, 8.507059e+37
    %v841 = vand.u32 %v828, 2147483648
    %v842 = vor.u32 1.1754944e-38, %v841
    %v843 = vsel %vm840, %v842, %v838
    %v844 = vmul.f32 1.0, %v843
    %v845 = vrcp.pop %v829
    %v846 = vmul.f32 %v829, %v845
    %v847 = vsub.f32 1.0, %v846
    %v848 = vmul.f32 %v845, %v847
    %v849 = vadd.f32 %v845, %v848
    %vm850 = vweird.f32 %v829
    %vm851 = vweird.f32 %v845
    %vm852 = vmor %vm850, %vm851
    %v853 = vsel %vm852, %v845, %v849
    %v854 = vand.u32 2147483647, %v829
    %vm855 = vcmp.eq.f32.partialorder %v854, 8.507059e+37
    %v856 = vand.u32 %v829, 2147483648
    %v857 = vor.u32 1.1754944e-38, %v856
    %v858 = vsel %vm855, %v857, %v853
    %v859 = vmul.f32 1.0, %v858
    %v860 = vadd.f32 %v789, %v815
    %v861 = vadd.f32 %v791, %v818
    %v862 = vxor.u32 %v860, 2147483648
    %v863 = vxor.u32 %v861, 2147483648
    %v864 = vmul.f32 %v862, 1.442695
    %v865 = vpow.pop %v864
    %v866 = vmul.f32 %v863, 1.442695
    %v867 = vpow.pop %v866
    %v868 = vadd.f32 %v865, 1.0
    %v869 = vadd.f32 %v867, 1.0
    %v870 = vrcp.pop %v868
    %v871 = vmul.f32 %v868, %v870
    %v872 = vsub.f32 1.0, %v871
    %v873 = vmul.f32 %v870, %v872
    %v874 = vadd.f32 %v870, %v873
    %vm875 = vweird.f32 %v868
    %vm876 = vweird.f32 %v870
    %vm877 = vmor %vm875, %vm876
    %v878 = vsel %vm877, %v870, %v874
    %v879 = vand.u32 2147483647, %v868
    %vm880 = vcmp.eq.f32.partialorder %v879, 8.507059e+37
    %v881 = vand.u32 %v868, 2147483648
    %v882 = vor.u32 1.1754944e-38, %v881
    %v883 = vsel %vm880, %v882, %v878
    %v884 = vmul.f32 1.0, %v883
    %v885 = vrcp.pop %v869
    %v886 = vmul.f32 %v869, %v885
    %v887 = vsub.f32 1.0, %v886
    %v888 = vmul.f32 %v885, %v887
    %v889 = vadd.f32 %v885, %v888
    %vm890 = vweird.f32 %v869
    %vm891 = vweird.f32 %v885
    %vm892 = vmor %vm890, %vm891
    %v893 = vsel %vm892, %v885, %v889
    %v894 = vand.u32 2147483647, %v869
    %vm895 = vcmp.eq.f32.partialorder %v894, 8.507059e+37
    %v896 = vand.u32 %v869, 2147483648
    %v897 = vor.u32 1.1754944e-38, %v896
    %v898 = vsel %vm895, %v897, %v893
    %v899 = vmul.f32 1.0, %v898
    %v900 = vmul.f32 %v844, %v816
    %v901 = vmul.f32 %v859, %v819
    %v902 = vadd.f32 %v803, %v900
    %v903 = vadd.f32 %v805, %v901
    %v904 = vtanh.pop %v902
    %v905 = vtanh.pop %v903
    %v906 = vsub.f32 1.0, %v884
    %v907 = vsub.f32 1.0, %v899
    %v908 = vmul.f32 %v906, %v904
    %v909 = vmul.f32 %v907, %v905
    %v910 = vmul.f32 %v884, %v49
    %v911 = vmul.f32 %v899, %v50
    %v912 = vadd.f32 %v908, %v910
    %v913 = vadd.f32 %v909, %v911
    %914 = vst [vmem:[#allocation2] sm:$0xff] %v912
    %915 = vst [vmem:[#allocation2 + $0x8] sm:$0xff] %v913
    %916 = vst [vmem:[%s6] sm:$0xff] %v912
    %917 = vst [vmem:[%s6 + $0x8] sm:$0xff] %v913
    %v918 = vpack.c.bf16 %v913, %v912
    %v920 = vperm.slane %v152, 0
    %v938 = vunpack.c.l.b16 %v132
    %v939 = vunpack.c.l.b16 %v133
    %v940 = vunpack.c.l.b16 %v134
    %v941 = vunpack.c.l.b16 %v135
    %v942 = vunpack.c.l.b16 %v136
    %v943 = vunpack.c.l.b16 %v137
    %v944 = vunpack.c.l.b16 %v138
    %v945 = vunpack.c.l.b16 %v139
    %v946 = vunpack.c.l.b16 %v140
    %v947 = vunpack.c.l.b16 %v141
    %v948 = vunpack.c.l.b16 %v142
    %v949 = vunpack.c.l.b16 %v143
    %v950 = vunpack.c.l.b16 %v144
    %v951 = vunpack.c.l.b16 %v145
    %v952 = vunpack.c.l.b16 %v146
    %v953 = vunpack.c.l.b16 %v147
    %v954 = vpack.c.b16 %v939, %v938
    %v955 = vpack.c.b16 %v941, %v940
    %v956 = vpack.c.b16 %v943, %v942
    %v957 = vpack.c.b16 %v945, %v944
    %v958 = vpack.c.b16 %v947, %v946
    %v959 = vpack.c.b16 %v949, %v948
    %v960 = vpack.c.b16 %v951, %v950
    %v961 = vpack.c.b16 %v953, %v952
    %970 = vmatpush.bf16.msra.mxu0 %v961
    %971 = vmatpush.bf16.msra.mxu0 %v960
    %972 = vmatpush.bf16.msra.mxu0 %v959
    %973 = vmatpush.bf16.msra.mxu0 %v958
    %974 = vmatpush.bf16.msra.mxu0 %v957
    %975 = vmatpush.bf16.msra.mxu0 %v956
    %976 = vmatpush.bf16.msra.mxu0 %v955
    %977 = vmatpush.bf16.msra.mxu0 %v954
    %978 = vmatmul.bf16.gmra.mxu0 %v918
    %v979 = vpop.f32.mrf.mxu0
    %v980 = vadd.f32 %v920, %v979
    %v981 = vpop.f32.mrf.mxu0
    %v982 = vadd.f32 %v920, %v981
    %983 = vdwg.mxu0
    %vm984 = vcmp.lt.s32.totalorder %v491, 64
    %v985 = vsel %vm984, %v980, -1e+30
    %v986 = vsel %vm984, %v982, -1e+30
    %987 = vmax.xlane.f32.xlu0 %v985
    %v988 = vpop.xlane.xlu0 %987
    %989 = vmax.xlane.f32.xlu0 %v986
    %v990 = vpop.xlane.xlu0 %989
    %v991 = vsub.f32 %v985, %v988
    %v992 = vsub.f32 %v986, %v990
    %v993 = vmul.f32 %v991, 1.442695
    %v994 = vpow.pop %v993
    %v995 = vmul.f32 %v992, 1.442695
    %v996 = vpow.pop %v995
    %997 = vadd.xlane.f32.xlu0 %v994
    %v998 = vpop.xlane.xlu0 %997
    %999 = vadd.xlane.f32.xlu0 %v996
    %v1000 = vpop.xlane.xlu0 %999
    %v1001 = vlog2.pop %v998
    %v1002 = vmul.f32 %v1001, 0.6931472
    %v1003 = vlog2.pop %v1000
    %v1004 = vmul.f32 %v1003, 0.6931472
    %v1005 = vadd.f32 %v1002, %v988
    %v1006 = vadd.f32 %v1004, %v990
    %v1007 = vsub.f32 %v985, %v1005
    %v1008 = vsub.f32 %v986, %v1006
    %1009 = vst [vmem:[%s5] sm:$0xff] %v1007
    %1010 = vst [vmem:[%s5 + $0x8] sm:$0xff] %v1008
    // Predicated region
    $region30: #{decode.1} parent=1 // pred_check
      _
    $region31: #{decode.1} parent=1 // pred_check_branch
      %1012 = sbr.rel (0) target = $region33
    $region32: #{decode.1} parent=1 // pred_region
      _
    $region33: #{decode.1} parent=1 // pred_fallthru
      _
    // Predicated region
    $region34: #{decode.1} parent=1 // pred_check
      _
    $region35: #{decode.1} parent=1 // pred_check_branch
      %1014 = sbr.rel (0) target = $region37
    $region36: #{decode.1} parent=1 // pred_region
      _
    $region37: #{decode.1} parent=1 // pred_fallthru
      _
    // Predicated region
    $region38: #{decode.1} parent=1 // pred_check
      _
    $region39: #{decode.1} parent=1 // pred_check_branch
      %1016 = sbr.rel (0) target = $region41
    $region40: #{decode.1} parent=1 // pred_region
      _
    $region41: #{decode.1} parent=1 // pred_fallthru
      _
    // Predicated region
    $region42: #{decode.1} parent=1 // pred_check
      _
    $region43: #{decode.1} parent=1 // pred_check_branch
      %1018 = sbr.rel (0) target = $region45
    $region44: #{decode.1} parent=1 // pred_region
      _
    $region45: #{decode.1} parent=1 // pred_fallthru
      _
    // Predicated region
    $region46: #{decode.1} parent=1 // pred_check
      _
    $region47: #{decode.1} parent=1 // pred_check_branch
      %1020 = sbr.rel (0) target = $region49
    $region48: #{decode.1} parent=1 // pred_region
      _
    $region49: #{decode.1} parent=1 // pred_fallthru
      _
    // Predicated region
    $region50: #{decode.1} parent=1 // pred_check
      _
    $region51: #{decode.1} parent=1 // pred_check_branch
      %1022 = sbr.rel (0) target = $region53
    $region52: #{decode.1} parent=1 // pred_region
      _
    $region53: #{decode.1} parent=1 // pred_fallthru
      _
    %1023 = vsyncpa [#allocation4], 1

</llo_original>
